<compile_context>
chip_gen: v6e
topology: v6e:2x2x1
jax: 0.10.0
libtpu: 0.0.40
codegen_flags: <defaults>
</compile_context>

<pallas_src>
import jax
import jax.numpy as jnp
from jax.experimental import pallas as pl
from jax.experimental.pallas import tpu as pltpu

HIDDEN = 128


def _round_up(n: int, m: int) -> int:
    return ((n + m - 1) // m) * m


def reward_mlp_kernel(x_ref, w1_ref, b1_ref, w2_ref, b2_ref, o_ref):
    # ---- Layer 1 on the MXU (f32 in, f32 accumulate) -----------------------
    # w1: (HIDDEN, K), x tile: (TILE_B, K); contract over K of both operands
    # -> h: (HIDDEN, TILE_B) with the batch on the lane axis.
    h = jax.lax.dot_general(
        w1_ref[...], x_ref[...],
        dimension_numbers=(((1,), (1,)), ((), ())),
        preferred_element_type=jnp.float32,
    )                                                    # (HIDDEN, TILE_B)
    # Bias + ReLU in f32 on the VPU (v5e-safe).
    h = jnp.maximum(h + b1_ref[...], 0.0)                # b1 is (HIDDEN, 1)

    # ---- Layer 2 as VPU multiply + sublane reduction -----------------------
    out = jnp.sum(h * w2_ref[...], axis=0, keepdims=True)    # (1, TILE_B)
    o_ref[...] = (out + b2_ref[0, 0]).astype(o_ref.dtype)    # lane-dense store


def _vmem_capacity_bytes() -> int:
    # Generation-aware VMEM query; conservative fallback = v7x's 64 MiB.
    try:
        info = pltpu.get_tpu_info()
        cap = getattr(info, "vmem_capacity_bytes", None)
        if cap:
            return int(cap)
    except Exception:
        pass
    return 64 << 20


def _pick_tile_b(B: int, K: int, tile_budget_bytes: int) -> int:
    """Pick a 128-aligned batch tile that fits the VMEM budget.

    Budget accounts for: 2x double-buffered f32 x tiles, 2x w1 blocks (be
    conservative: assume the compiler double-buffers even constant blocks),
    the (128, tile_b) f32 hidden temp, and the double-buffered output row.
    """
    k_pad = _round_up(K, 128)
    fixed = 2 * HIDDEN * k_pad * 4 + 2 * 2 * HIDDEN * 4        # w1, b1, w2
    per_row = 2 * k_pad * 4 + HIDDEN * 4 + 2 * 4               # x(x2), h, out(x2)
    avail = max(tile_budget_bytes - fixed, per_row * 128)
    t = (avail // per_row) // 128 * 128
    t = max(128, min(16384, t))
    # Guarantee >=2 grid steps when the batch allows it (v7x megacore).
    half_b = _round_up(max((B + 1) // 2, 1), 128)
    return min(t, max(128, half_b))


def reward_function_forward(x, w1, b1, w2, b2, *, tile_b=None):
    """x: (B, K) f32; w1: (128, K); b1: (128,); w2: (1, 128); b2: (1,).

    Returns (B, 1) f32, matching the PyTorch module.
    """
    B, K = x.shape
    assert w1.shape == (HIDDEN, K)

    x = x.astype(jnp.float32)
    w1_f = w1.astype(jnp.float32)
    b1_col = b1.reshape(HIDDEN, 1).astype(jnp.float32)
    w2_col = w2.reshape(HIDDEN, 1).astype(jnp.float32)
    b2_s = b2.reshape(1, 1).astype(jnp.float32)

    vmem_cap = _vmem_capacity_bytes()
    tile_budget = min(vmem_cap // 2, 32 << 20)
    if tile_b is None:
        tile_b = _pick_tile_b(B, K, tile_budget)
    tile_b = max(128, _round_up(tile_b, 128))

    num_tiles = pl.cdiv(B, tile_b)   # ragged last block handled by Pallas

    # Explicit scoped-VMEM limit: enough for our tiles + headroom, never above
    # physical capacity (v7x = 64 MiB), always >= the generous defaults.
    k_pad = _round_up(K, 128)
    need = (2 * tile_b * k_pad * 4          # x double buffer
            + 2 * HIDDEN * k_pad * 4        # w1
            + HIDDEN * tile_b * 4           # h temp
            + 2 * tile_b * 4                # out double buffer
            + 4 * HIDDEN * 4)               # b1, w2
    vmem_limit = int(min(vmem_cap, max(32 << 20, need + (8 << 20))))

    cost = pl.CostEstimate(
        flops=2 * B * K * HIDDEN + 5 * B * HIDDEN,
        bytes_accessed=(B * K * 4            # x (f32, single HBM pass)
                        + HIDDEN * K * 4     # w1
                        + 2 * HIDDEN * 4 + 4 # b1, w2, b2
                        + B * 4),            # output
        transcendentals=0,
    )

    out = pl.pallas_call(
        reward_mlp_kernel,
        out_shape=jax.ShapeDtypeStruct((1, B), jnp.float32),
        grid=(num_tiles,),
        in_specs=[
            pl.BlockSpec((tile_b, K), lambda i: (i, 0)),       # x tile (pipelined)
            pl.BlockSpec((HIDDEN, K), lambda i: (0, 0)),       # w1 (VMEM-resident)
            pl.BlockSpec((HIDDEN, 1), lambda i: (0, 0)),       # b1 (VMEM-resident)
            pl.BlockSpec((HIDDEN, 1), lambda i: (0, 0)),       # w2 (VMEM-resident)
            pl.BlockSpec(memory_space=pltpu.MemorySpace.SMEM), # b2 scalar
        ],
        out_specs=pl.BlockSpec((1, tile_b), lambda i: (0, i)),  # lane-dense out
        compiler_params=pltpu.CompilerParams(
            dimension_semantics=("parallel",),
            vmem_limit_bytes=vmem_limit,
        ),
        cost_estimate=cost,
    )(x, w1_f, b1_col, w2_col, b2_s)

    # (1, B) lane-dense row -> (B, 1) to match the PyTorch module output.
    return out.reshape(B, 1)


def init_params(input_size, key):
    # PyTorch nn.Linear default init: U(-1/sqrt(fan_in), +1/sqrt(fan_in)),
    # stored in PyTorch-native layouts (weight = (out_features, in_features)).
    k1, k2, k3, k4 = jax.random.split(key, 4)
    bound1 = 1.0 / (input_size ** 0.5)
    bound2 = 1.0 / (HIDDEN ** 0.5)
    w1 = jax.random.uniform(k1, (HIDDEN, input_size), jnp.float32, -bound1, bound1)
    b1 = jax.random.uniform(k2, (HIDDEN,), jnp.float32, -bound1, bound1)
    w2 = jax.random.uniform(k3, (1, HIDDEN), jnp.float32, -bound2, bound2)
    b2 = jax.random.uniform(k4, (1,), jnp.float32, -bound2, bound2)
    return w1, b1, w2, b2


if __name__ == "__main__":
    key = jax.random.PRNGKey(0)
    input_size = 32
    batch = 8

    pkey, xkey = jax.random.split(key)
    w1, b1, w2, b2 = init_params(input_size, pkey)
    x = jax.random.normal(xkey, (batch, input_size), jnp.float32)

    out = reward_function_forward(x, w1, b1, w2, b2)
    out = jax.block_until_ready(out)
    assert out.shape == (batch, 1)

    # Pure-f32 reference: relu(x @ W1^T + b1) @ W2^T + b2.
    h_ref = jax.lax.dot_general(
        x, w1, dimension_numbers=(((1,), (1,)), ((), ())),
        precision=jax.lax.Precision.HIGHEST,
        preferred_element_type=jnp.float32)
    h_ref = jnp.maximum(h_ref + b1[None, :], 0.0)
    ref = jnp.dot(h_ref, w2.T, precision=jax.lax.Precision.HIGHEST) + b2[None, :]

    assert jnp.allclose(out, ref, atol=2e-3, rtol=2e-3), (
        f"max abs diff = {jnp.max(jnp.abs(out - ref))}")

    print("KERNEL_OK")
</pallas_src>

<mosaic_0001>
module attributes {stable_mosaic.version = 11 : i64} {
  func.func @reward_mlp_kernel(%arg0: i32, %arg1: memref<128x32xf32, #tpu.memory_space<vmem>>, %arg2: memref<128x32xf32, #tpu.memory_space<vmem>>, %arg3: memref<128x1xf32, #tpu.memory_space<vmem>>, %arg4: memref<128x1xf32, #tpu.memory_space<vmem>>, %arg5: memref<1x1xf32, #tpu.memory_space<smem>>, %arg6: memref<1x128xf32, #tpu.memory_space<vmem>>) attributes {dimension_semantics = [#tpu.dimension_semantics<parallel>], iteration_bounds = array<i64: 1>, scalar_prefetch = 0 : i64, scratch_operands = 0 : i64, tpu.core_type = #tpu.core_type<tc>, window_params = [{transform_indices = @transform_0, window_bounds = array<i64: 128, 32>}, {pipeline_mode = #tpu.pipeline_mode<synchronous>, transform_indices = @transform_1, window_bounds = array<i64: 128, 32>}, {pipeline_mode = #tpu.pipeline_mode<synchronous>, transform_indices = @transform_2, window_bounds = array<i64: 128, 1>}, {pipeline_mode = #tpu.pipeline_mode<synchronous>, transform_indices = @transform_3, window_bounds = array<i64: 128, 1>}, {transform_indices = @transform_4, window_bounds = array<i64: 1, 1>}, {transform_indices = @transform_5, window_bounds = array<i64: 1, 128>}]} {
    %c0 = arith.constant 0 : index
    %c0_0 = arith.constant 0 : index
    %0 = vector.load %arg2[%c0, %c0_0] : memref<128x32xf32, #tpu.memory_space<vmem>>, vector<128x32xf32>
    %c0_1 = arith.constant 0 : index
    %c0_2 = arith.constant 0 : index
    %1 = vector.load %arg1[%c0_1, %c0_2] : memref<128x32xf32, #tpu.memory_space<vmem>>, vector<128x32xf32>
    %cst = arith.constant dense<0.000000e+00> : vector<128x128xf32>
    %2 = tpu.matmul %0, %1, %cst {dimension_numbers = #tpu.dot_dimension_numbers<[1], [1], [0], [0], [0, 0, 1, 0], [], []>} : vector<128x32xf32>, vector<128x32xf32>, vector<128x128xf32> -> vector<128x128xf32>
    %c0_3 = arith.constant 0 : index
    %c0_4 = arith.constant 0 : index
    %3 = vector.load %arg3[%c0_3, %c0_4] : memref<128x1xf32, #tpu.memory_space<vmem>>, vector<128x1xf32>
    %4 = vector.broadcast %3 : vector<128x1xf32> to vector<128x128xf32>
    %5 = arith.addf %2, %4 : vector<128x128xf32>
    %cst_5 = arith.constant 0.000000e+00 : f32
    %6 = vector.broadcast %cst_5 : f32 to vector<128x128xf32>
    %7 = arith.maximumf %5, %6 : vector<128x128xf32>
    %c0_6 = arith.constant 0 : index
    %c0_7 = arith.constant 0 : index
    %8 = vector.load %arg4[%c0_6, %c0_7] : memref<128x1xf32, #tpu.memory_space<vmem>>, vector<128x1xf32>
    %9 = vector.broadcast %8 : vector<128x1xf32> to vector<128x128xf32>
    %10 = arith.mulf %7, %9 : vector<128x128xf32>
    %cst_8 = arith.constant dense<0.000000e+00> : vector<128xf32>
    %11 = vector.multi_reduction <add>, %10, %cst_8 [0] : vector<128x128xf32> to vector<128xf32>
    %12 = vector.shape_cast %11 : vector<128xf32> to vector<1x128xf32>
    %c0_9 = arith.constant 0 : index
    %c0_10 = arith.constant 0 : index
    %13 = memref.load %arg5[%c0_9, %c0_10] : memref<1x1xf32, #tpu.memory_space<smem>>
    %14 = vector.broadcast %13 : f32 to vector<1x128xf32>
    %15 = arith.addf %12, %14 : vector<1x128xf32>
    %c0_11 = arith.constant 0 : index
    %c0_12 = arith.constant 0 : index
    %16 = vector.load %arg6[%c0_11, %c0_12] : memref<1x128xf32, #tpu.memory_space<vmem>>, vector<1x128xf32>
    tpu.vector_store %arg6[%c0_11, %c0_12], %15 {strides = array<i32>} : memref<1x128xf32, #tpu.memory_space<vmem>>, vector<1x128xf32>,
    return
  }
  func.func @transform_0(%arg0: i32) -> (i32, i32) {
    %c0_i32 = arith.constant 0 : i32
    %c0_i32_0 = arith.constant 0 : i32
    return %arg0, %c0_i32 : i32, i32
  }
  func.func @transform_1(%arg0: i32) -> (i32, i32) {
    %c0_i32 = arith.constant 0 : i32
    %c0_i32_0 = arith.constant 0 : i32
    %c0_i32_1 = arith.constant 0 : i32
    return %c0_i32, %c0_i32_0 : i32, i32
  }
  func.func @transform_2(%arg0: i32) -> (i32, i32) {
    %c0_i32 = arith.constant 0 : i32
    %c0_i32_0 = arith.constant 0 : i32
    %c0_i32_1 = arith.constant 0 : i32
    return %c0_i32, %c0_i32_0 : i32, i32
  }
  func.func @transform_3(%arg0: i32) -> (i32, i32) {
    %c0_i32 = arith.constant 0 : i32
    %c0_i32_0 = arith.constant 0 : i32
    %c0_i32_1 = arith.constant 0 : i32
    return %c0_i32, %c0_i32_0 : i32, i32
  }
  func.func @transform_4(%arg0: i32) -> (i32, i32) {
    %c0_i32 = arith.constant 0 : i32
    %c0_i32_0 = arith.constant 0 : i32
    %c0_i32_1 = arith.constant 0 : i32
    return %c0_i32, %c0_i32_0 : i32, i32
  }
  func.func @transform_5(%arg0: i32) -> (i32, i32) {
    %c0_i32 = arith.constant 0 : i32
    %c0_i32_0 = arith.constant 0 : i32
    return %c0_i32, %arg0 : i32, i32
  }
}

</mosaic_0001>

<llo_original>
// kernel: tpu_custom_call.1
$region0: #{tpu_custom_call.1}
  #allocation0 [shape = 'u32[]', space=smem, size = 0x4, offset = 0x4, fixed_abs, tag = 'smem constant byte address 0x4 - core index']
  #allocation1 [shape = 'u32[144,128]{1,0:T(1,128)}', space=vmem, size = 0x12000, scoped, tag = 'internal scratch']
  #allocation2 [shape = 'f32[1,1]{1,0:T(1,128)S(6)}', space=smem, size = 0x200, scoped, tag = 'scoped memory for tpu_custom_call.1']
  %s0 = inlined_call_operand.vmem [shape: f32[8,32], index: 0, kind: input, shape index: {}]
  %s1 = inlined_call_operand.vmem [shape: f32[128,32], index: 1, kind: input, shape index: {}]
  %s2 = inlined_call_operand.vmem [shape: f32[128,1], index: 2, kind: input, shape index: {}]
  %s3 = inlined_call_operand.vmem [shape: f32[128,1], index: 3, kind: input, shape index: {}]
  %s4 = inlined_call_operand.<no memory space> [shape: f32[1,1], index: 4, kind: input, shape index: {}]
  %s5 = inlined_call_operand.hbm [shape: f32[1,8], index: 5, kind: output, shape index: {}]
  %s6 = sld [smem:[#allocation0]]
  $region30: #{tpu_custom_call.1} parent=0
    _
  %s8 = ssub.s32 1, %s6
  %s9 = scalar_select 0, %s8, %s6
  %10 = sst [smem:[#allocation2]] %s4
  $region1: #{tpu_custom_call.1} parent=0
    #allocation3 [shape = 'u8[512]{0}', space=vmem, size = 0x400, scoped, tag = 'output window, operand 0, single buffered']
    #allocation4 [shape = 's32[1]{0}', space=sflag, size = 0x4, scoped, tag = 'scoped memory for tpu_custom_call.1']
    %11 = vsyncpa [#allocation4], 0
    // Predicated region
    $region2: #{tpu_custom_call.1} parent=1 // pred_check
      _
    $region3: #{tpu_custom_call.1} parent=1 // pred_check_branch
      %13 = sbr.rel (0) target = $region5
    $region4: #{tpu_custom_call.1} parent=1 // pred_region
      _
    $region5: #{tpu_custom_call.1} parent=1 // pred_fallthru
      _
    // Predicated region
    $region6: #{tpu_custom_call.1} parent=1 // pred_check
      _
    $region7: #{tpu_custom_call.1} parent=1 // pred_check_branch
      %15 = sbr.rel (0) target = $region9
    $region8: #{tpu_custom_call.1} parent=1 // pred_region
      _
    $region9: #{tpu_custom_call.1} parent=1 // pred_fallthru
      _
    // Predicated region
    $region10: #{tpu_custom_call.1} parent=1 // pred_check
      _
    $region11: #{tpu_custom_call.1} parent=1 // pred_check_branch
      %17 = sbr.rel (0) target = $region13
    $region12: #{tpu_custom_call.1} parent=1 // pred_region
      _
    $region13: #{tpu_custom_call.1} parent=1 // pred_fallthru
      _
    // Predicated region
    $region14: #{tpu_custom_call.1} parent=1 // pred_check
      _
    $region15: #{tpu_custom_call.1} parent=1 // pred_check_branch
      %19 = sbr.rel (0) target = $region17
    $region16: #{tpu_custom_call.1} parent=1 // pred_region
      _
    $region17: #{tpu_custom_call.1} parent=1 // pred_fallthru
      _
    // Predicated region
    $region18: #{tpu_custom_call.1} parent=1 // pred_check
      _
    $region19: #{tpu_custom_call.1} parent=1 // pred_check_branch
      %21 = sbr.rel (0) target = $region21
    $region20: #{tpu_custom_call.1} parent=1 // pred_region
      _
    $region21: #{tpu_custom_call.1} parent=1 // pred_fallthru
      _
    %v22 = vld [vmem:[%s1] sm:$0xff]
    %v23 = vld [vmem:[%s1 + $0x8] sm:$0xff]
    %v24 = vld [vmem:[%s1 + $0x10] sm:$0xff]
    %v25 = vld [vmem:[%s1 + $0x18] sm:$0xff]
    %v26 = vld [vmem:[%s1 + $0x20] sm:$0xff]
    %v27 = vld [vmem:[%s1 + $0x28] sm:$0xff]
    %v28 = vld [vmem:[%s1 + $0x30] sm:$0xff]
    %v29 = vld [vmem:[%s1 + $0x38] sm:$0xff]
    %v30 = vld [vmem:[%s1 + $0x40] sm:$0xff]
    %v31 = vld [vmem:[%s1 + $0x48] sm:$0xff]
    %v32 = vld [vmem:[%s1 + $0x50] sm:$0xff]
    %v33 = vld [vmem:[%s1 + $0x58] sm:$0xff]
    %v34 = vld [vmem:[%s1 + $0x60] sm:$0xff]
    %v35 = vld [vmem:[%s1 + $0x68] sm:$0xff]
    %v36 = vld [vmem:[%s1 + $0x70] sm:$0xff]
    %v37 = vld [vmem:[%s1 + $0x78] sm:$0xff]
    %v38 = vld [vmem:[%s0] sm:$0xff]
    %v39 = vld [vmem:[%s0 + $0x8] sm:$0xff]
    %v40 = vld [vmem:[%s0 + $0x10] sm:$0xff]
    %v41 = vld [vmem:[%s0 + $0x18] sm:$0xff]
    %v42 = vld [vmem:[%s0 + $0x20] sm:$0xff]
    %v43 = vld [vmem:[%s0 + $0x28] sm:$0xff]
    %v44 = vld [vmem:[%s0 + $0x30] sm:$0xff]
    %v45 = vld [vmem:[%s0 + $0x38] sm:$0xff]
    %v46 = vld [vmem:[%s0 + $0x40] sm:$0xff]
    %v47 = vld [vmem:[%s0 + $0x48] sm:$0xff]
    %v48 = vld [vmem:[%s0 + $0x50] sm:$0xff]
    %v49 = vld [vmem:[%s0 + $0x58] sm:$0xff]
    %v50 = vld [vmem:[%s0 + $0x60] sm:$0xff]
    %v51 = vld [vmem:[%s0 + $0x68] sm:$0xff]
    %v52 = vld [vmem:[%s0 + $0x70] sm:$0xff]
    %v53 = vld [vmem:[%s0 + $0x78] sm:$0xff]
    %v54 = vld [vmem:[%s2] sm:$0xff]
    %v55 = vld [vmem:[%s2 + $0x8] sm:$0xff]
    %v56 = vld [vmem:[%s2 + $0x10] sm:$0xff]
    %v57 = vld [vmem:[%s2 + $0x18] sm:$0xff]
    %v58 = vld [vmem:[%s2 + $0x20] sm:$0xff]
    %v59 = vld [vmem:[%s2 + $0x28] sm:$0xff]
    %v60 = vld [vmem:[%s2 + $0x30] sm:$0xff]
    %v61 = vld [vmem:[%s2 + $0x38] sm:$0xff]
    %v62 = vld [vmem:[%s2 + $0x40] sm:$0xff]
    %v63 = vld [vmem:[%s2 + $0x48] sm:$0xff]
    %v64 = vld [vmem:[%s2 + $0x50] sm:$0xff]
    %v65 = vld [vmem:[%s2 + $0x58] sm:$0xff]
    %v66 = vld [vmem:[%s2 + $0x60] sm:$0xff]
    %v67 = vld [vmem:[%s2 + $0x68] sm:$0xff]
    %v68 = vld [vmem:[%s2 + $0x70] sm:$0xff]
    %v69 = vld [vmem:[%s2 + $0x78] sm:$0xff]
    %71 = vset.pattern.permute.xlu0 0
    %72 = vperm.xlu0 %71, %v54
    %v73 = vpop.permute.xlu0 %72
    %76 = vset.pattern.permute.xlu0 0
    %77 = vperm.xlu0 %76, %v55
    %v78 = vpop.permute.xlu0 %77
    %81 = vset.pattern.permute.xlu0 0
    %82 = vperm.xlu0 %81, %v56
    %v83 = vpop.permute.xlu0 %82
    %86 = vset.pattern.permute.xlu0 0
    %87 = vperm.xlu0 %86, %v57
    %v88 = vpop.permute.xlu0 %87
    %91 = vset.pattern.permute.xlu0 0
    %92 = vperm.xlu0 %91, %v58
    %v93 = vpop.permute.xlu0 %92
    %96 = vset.pattern.permute.xlu0 0
    %97 = vperm.xlu0 %96, %v59
    %v98 = vpop.permute.xlu0 %97
    %101 = vset.pattern.permute.xlu0 0
    %102 = vperm.xlu0 %101, %v60
    %v103 = vpop.permute.xlu0 %102
    %106 = vset.pattern.permute.xlu0 0
    %107 = vperm.xlu0 %106, %v61
    %v108 = vpop.permute.xlu0 %107
    %111 = vset.pattern.permute.xlu0 0
    %112 = vperm.xlu0 %111, %v62
    %v113 = vpop.permute.xlu0 %112
    %116 = vset.pattern.permute.xlu0 0
    %117 = vperm.xlu0 %116, %v63
    %v118 = vpop.permute.xlu0 %117
    %121 = vset.pattern.permute.xlu0 0
    %122 = vperm.xlu0 %121, %v64
    %v123 = vpop.permute.xlu0 %122
    %126 = vset.pattern.permute.xlu0 0
    %127 = vperm.xlu0 %126, %v65
    %v128 = vpop.permute.xlu0 %127
    %131 = vset.pattern.permute.xlu0 0
    %132 = vperm.xlu0 %131, %v66
    %v133 = vpop.permute.xlu0 %132
    %136 = vset.pattern.permute.xlu0 0
    %137 = vperm.xlu0 %136, %v67
    %v138 = vpop.permute.xlu0 %137
    %141 = vset.pattern.permute.xlu0 0
    %142 = vperm.xlu0 %141, %v68
    %v143 = vpop.permute.xlu0 %142
    %146 = vset.pattern.permute.xlu0 0
    %147 = vperm.xlu0 %146, %v69
    %v148 = vpop.permute.xlu0 %147
    %vm150 = vcmask 261120
    %v152 = vsel %vm150, %v22, 0
    %v155 = vsel %vm150, %v23, 0
    %v158 = vsel %vm150, %v24, 0
    %v161 = vsel %vm150, %v25, 0
    %v164 = vsel %vm150, %v26, 0
    %v167 = vsel %vm150, %v27, 0
    %v170 = vsel %vm150, %v28, 0
    %v173 = vsel %vm150, %v29, 0
    %v176 = vsel %vm150, %v30, 0
    %v179 = vsel %vm150, %v31, 0
    %v182 = vsel %vm150, %v32, 0
    %v185 = vsel %vm150, %v33, 0
    %v188 = vsel %vm150, %v34, 0
    %v191 = vsel %vm150, %v35, 0
    %v194 = vsel %vm150, %v36, 0
    %v197 = vsel %vm150, %v37, 0
    %v200 = vsel %vm150, %v38, 0
    %v203 = vsel %vm150, %v39, 0
    %v206 = vsel %vm150, %v40, 0
    %v209 = vsel %vm150, %v41, 0
    %v212 = vsel %vm150, %v42, 0
    %v215 = vsel %vm150, %v43, 0
    %v218 = vsel %vm150, %v44, 0
    %v221 = vsel %vm150, %v45, 0
    %v224 = vsel %vm150, %v46, 0
    %v227 = vsel %vm150, %v47, 0
    %v230 = vsel %vm150, %v48, 0
    %v233 = vsel %vm150, %v49, 0
    %v236 = vsel %vm150, %v50, 0
    %v239 = vsel %vm150, %v51, 0
    %v242 = vsel %vm150, %v52, 0
    %v245 = vsel %vm150, %v53, 0
    %247 = vmatprep.subr.mxu0 0.0
    %248 = vmatpush1.xpose.msra.mxu0 %v245
    %249 = vmatprep.subr.mxu0 0.0
    %250 = vmatpush1.xpose.msra.mxu0 %v242
    %251 = vmatprep.subr.mxu0 0.0
    %252 = vmatpush1.xpose.msra.mxu0 %v239
    %253 = vmatprep.subr.mxu0 0.0
    %254 = vmatpush1.xpose.msra.mxu0 %v236
    %255 = vmatprep.subr.mxu0 0.0
    %256 = vmatpush1.xpose.msra.mxu0 %v233
    %257 = vmatprep.subr.mxu0 0.0
    %258 = vmatpush1.xpose.msra.mxu0 %v230
    %259 = vmatprep.subr.mxu0 0.0
    %260 = vmatpush1.xpose.msra.mxu0 %v227
    %261 = vmatprep.subr.mxu0 0.0
    %262 = vmatpush1.xpose.msra.mxu0 %v224
    %263 = vmatprep.subr.mxu0 0.0
    %264 = vmatpush1.xpose.msra.mxu0 %v221
    %265 = vmatprep.subr.mxu0 0.0
    %266 = vmatpush1.xpose.msra.mxu0 %v218
    %267 = vmatprep.subr.mxu0 0.0
    %268 = vmatpush1.xpose.msra.mxu0 %v215
    %269 = vmatprep.subr.mxu0 0.0
    %270 = vmatpush1.xpose.msra.mxu0 %v212
    %271 = vmatprep.subr.mxu0 0.0
    %272 = vmatpush1.xpose.msra.mxu0 %v209
    %273 = vmatprep.subr.mxu0 0.0
    %274 = vmatpush1.xpose.msra.mxu0 %v206
    %275 = vmatprep.subr.mxu0 0.0
    %276 = vmatpush1.xpose.msra.mxu0 %v203
    %277 = vmatprep.subr.mxu0 0.0
    %278 = vmatpush1.xpose.msra.mxu0 %v200
    %279 = vmatprep.subr.mxu0 0.0
    %280 = vmatpush2.xpose.msra.mxu0 0.0
    %281 = vmatprep.subr.mxu0 0.0
    %282 = vmatpush2.xpose.msra.mxu0 0.0
    %283 = vmatprep.subr.mxu0 0.0
    %284 = vmatpush2.xpose.msra.mxu0 0.0
    %285 = vmatprep.subr.mxu0 0.0
    %286 = vmatpush2.xpose.msra.mxu0 0.0
    %287 = vmatprep.subr.mxu0 0.0
    %288 = vmatpush2.xpose.msra.mxu0 0.0
    %289 = vmatprep.subr.mxu0 0.0
    %290 = vmatpush2.xpose.msra.mxu0 0.0
    %291 = vmatprep.subr.mxu0 0.0
    %292 = vmatpush2.xpose.msra.mxu0 0.0
    %293 = vmatprep.subr.mxu0 0.0
    %294 = vmatpush2.xpose.msra.mxu0 0.0
    %295 = vmatprep.subr.mxu0 0.0
    %296 = vmatpush2.xpose.msra.mxu0 0.0
    %297 = vmatprep.subr.mxu0 0.0
    %298 = vmatpush2.xpose.msra.mxu0 0.0
    %299 = vmatprep.subr.mxu0 0.0
    %300 = vmatpush2.xpose.msra.mxu0 0.0
    %301 = vmatprep.subr.mxu0 0.0
    %302 = vmatpush2.xpose.msra.mxu0 0.0
    %303 = vmatprep.subr.mxu0 0.0
    %304 = vmatpush2.xpose.msra.mxu0 0.0
    %305 = vmatprep.subr.mxu0 0.0
    %306 = vmatpush2.xpose.msra.mxu0 0.0
    %307 = vmatprep.subr.mxu0 0.0
    %308 = vmatpush2.xpose.msra.mxu0 0.0
    %309 = vmatprep.subr.mxu0 0.0
    %310 = vmatpush2.xpose.msra.mxu0 0.0
    %311 = vmatprep.mubr.f32.mxu0 0.0
    %312 = vmatmul.mubr.f32.gmra.mxu0 %v152
    %v313 = vpop.f32.mrf.mxu0
    %v314 = vadd.f32 %v73, %v313
    %v315 = vpop.f32.mrf.mxu0
    %316 = vmatprep.mubr.f32.mxu0 0.0
    %317 = vmatmul.mubr.f32.gmra.mxu0 %v155
    %v318 = vpop.f32.mrf.mxu0
    %v319 = vadd.f32 %v78, %v318
    %v320 = vpop.f32.mrf.mxu0
    %321 = vmatprep.mubr.f32.mxu0 0.0
    %322 = vmatmul.mubr.f32.gmra.mxu0 %v158
    %v323 = vpop.f32.mrf.mxu0
    %v324 = vadd.f32 %v83, %v323
    %v325 = vpop.f32.mrf.mxu0
    %326 = vmatprep.mubr.f32.mxu0 0.0
    %327 = vmatmul.mubr.f32.gmra.mxu0 %v161
    %v328 = vpop.f32.mrf.mxu0
    %v329 = vadd.f32 %v88, %v328
    %v330 = vpop.f32.mrf.mxu0
    %331 = vmatprep.mubr.f32.mxu0 0.0
    %332 = vmatmul.mubr.f32.gmra.mxu0 %v164
    %v333 = vpop.f32.mrf.mxu0
    %v334 = vadd.f32 %v93, %v333
    %v335 = vpop.f32.mrf.mxu0
    %336 = vmatprep.mubr.f32.mxu0 0.0
    %337 = vmatmul.mubr.f32.gmra.mxu0 %v167
    %v338 = vpop.f32.mrf.mxu0
    %v339 = vadd.f32 %v98, %v338
    %v340 = vpop.f32.mrf.mxu0
    %341 = vmatprep.mubr.f32.mxu0 0.0
    %342 = vmatmul.mubr.f32.gmra.mxu0 %v170
    %v343 = vpop.f32.mrf.mxu0
    %v344 = vadd.f32 %v103, %v343
    %v345 = vpop.f32.mrf.mxu0
    %346 = vmatprep.mubr.f32.mxu0 0.0
    %347 = vmatmul.mubr.f32.gmra.mxu0 %v173
    %v348 = vpop.f32.mrf.mxu0
    %v349 = vadd.f32 %v108, %v348
    %v350 = vpop.f32.mrf.mxu0
    %351 = vmatprep.mubr.f32.mxu0 0.0
    %352 = vmatmul.mubr.f32.gmra.mxu0 %v176
    %v353 = vpop.f32.mrf.mxu0
    %v354 = vadd.f32 %v113, %v353
    %v355 = vpop.f32.mrf.mxu0
    %356 = vmatprep.mubr.f32.mxu0 0.0
    %357 = vmatmul.mubr.f32.gmra.mxu0 %v179
    %v358 = vpop.f32.mrf.mxu0
    %v359 = vadd.f32 %v118, %v358
    %v360 = vpop.f32.mrf.mxu0
    %361 = vmatprep.mubr.f32.mxu0 0.0
    %362 = vmatmul.mubr.f32.gmra.mxu0 %v182
    %v363 = vpop.f32.mrf.mxu0
    %v364 = vadd.f32 %v123, %v363
    %v365 = vpop.f32.mrf.mxu0
    %366 = vmatprep.mubr.f32.mxu0 0.0
    %367 = vmatmul.mubr.f32.gmra.mxu0 %v185
    %v368 = vpop.f32.mrf.mxu0
    %v369 = vadd.f32 %v128, %v368
    %v370 = vpop.f32.mrf.mxu0
    %371 = vmatprep.mubr.f32.mxu0 0.0
    %372 = vmatmul.mubr.f32.gmra.mxu0 %v188
    %v373 = vpop.f32.mrf.mxu0
    %v374 = vadd.f32 %v133, %v373
    %v375 = vpop.f32.mrf.mxu0
    %376 = vmatprep.mubr.f32.mxu0 0.0
    %377 = vmatmul.mubr.f32.gmra.mxu0 %v191
    %v378 = vpop.f32.mrf.mxu0
    %v379 = vadd.f32 %v138, %v378
    %v380 = vpop.f32.mrf.mxu0
    %381 = vmatprep.mubr.f32.mxu0 0.0
    %382 = vmatmul.mubr.f32.gmra.mxu0 %v194
    %v383 = vpop.f32.mrf.mxu0
    %v384 = vadd.f32 %v143, %v383
    %v385 = vpop.f32.mrf.mxu0
    %386 = vmatprep.mubr.f32.mxu0 0.0
    %387 = vmatmul.mubr.f32.gmra.mxu0 %v197
    %v388 = vpop.f32.mrf.mxu0
    %v389 = vadd.f32 %v148, %v388
    %v390 = vpop.f32.mrf.mxu0
    %391 = vdwg.mxu0
    %v392 = vmax.f32 %v314, 0.0
    %v393 = vmax.f32 %v319, 0.0
    %v394 = vmax.f32 %v324, 0.0
    %v395 = vmax.f32 %v329, 0.0
    %v396 = vmax.f32 %v334, 0.0
    %v397 = vmax.f32 %v339, 0.0
    %v398 = vmax.f32 %v344, 0.0
    %v399 = vmax.f32 %v349, 0.0
    %v400 = vmax.f32 %v354, 0.0
    %v401 = vmax.f32 %v359, 0.0
    %v402 = vmax.f32 %v364, 0.0
    %v403 = vmax.f32 %v369, 0.0
    %v404 = vmax.f32 %v374, 0.0
    %v405 = vmax.f32 %v379, 0.0
    %v406 = vmax.f32 %v384, 0.0
    %v407 = vmax.f32 %v389, 0.0
    %v408 = vld [vmem:[%s3] sm:$0xff]
    %v409 = vld [vmem:[%s3 + $0x8] sm:$0xff]
    %v410 = vld [vmem:[%s3 + $0x10] sm:$0xff]
    %v411 = vld [vmem:[%s3 + $0x18] sm:$0xff]
    %v412 = vld [vmem:[%s3 + $0x20] sm:$0xff]
    %v413 = vld [vmem:[%s3 + $0x28] sm:$0xff]
    %v414 = vld [vmem:[%s3 + $0x30] sm:$0xff]
    %v415 = vld [vmem:[%s3 + $0x38] sm:$0xff]
    %v416 = vld [vmem:[%s3 + $0x40] sm:$0xff]
    %v417 = vld [vmem:[%s3 + $0x48] sm:$0xff]
    %v418 = vld [vmem:[%s3 + $0x50] sm:$0xff]
    %v419 = vld [vmem:[%s3 + $0x58] sm:$0xff]
    %v420 = vld [vmem:[%s3 + $0x60] sm:$0xff]
    %v421 = vld [vmem:[%s3 + $0x68] sm:$0xff]
    %v422 = vld [vmem:[%s3 + $0x70] sm:$0xff]
    %v423 = vld [vmem:[%s3 + $0x78] sm:$0xff]
    %425 = vset.pattern.permute.xlu0 0
    %426 = vperm.xlu0 %425, %v408
    %v427 = vpop.permute.xlu0 %426
    %430 = vset.pattern.permute.xlu0 0
    %431 = vperm.xlu0 %430, %v409
    %v432 = vpop.permute.xlu0 %431
    %435 = vset.pattern.permute.xlu0 0
    %436 = vperm.xlu0 %435, %v410
    %v437 = vpop.permute.xlu0 %436
    %440 = vset.pattern.permute.xlu0 0
    %441 = vperm.xlu0 %440, %v411
    %v442 = vpop.permute.xlu0 %441
    %445 = vset.pattern.permute.xlu0 0
    %446 = vperm.xlu0 %445, %v412
    %v447 = vpop.permute.xlu0 %446
    %450 = vset.pattern.permute.xlu0 0
    %451 = vperm.xlu0 %450, %v413
    %v452 = vpop.permute.xlu0 %451
    %455 = vset.pattern.permute.xlu0 0
    %456 = vperm.xlu0 %455, %v414
    %v457 = vpop.permute.xlu0 %456
    %460 = vset.pattern.permute.xlu0 0
    %461 = vperm.xlu0 %460, %v415
    %v462 = vpop.permute.xlu0 %461
    %465 = vset.pattern.permute.xlu0 0
    %466 = vperm.xlu0 %465, %v416
    %v467 = vpop.permute.xlu0 %466
    %470 = vset.pattern.permute.xlu0 0
    %471 = vperm.xlu0 %470, %v417
    %v472 = vpop.permute.xlu0 %471
    %475 = vset.pattern.permute.xlu0 0
    %476 = vperm.xlu0 %475, %v418
    %v477 = vpop.permute.xlu0 %476
    %480 = vset.pattern.permute.xlu0 0
    %481 = vperm.xlu0 %480, %v419
    %v482 = vpop.permute.xlu0 %481
    %485 = vset.pattern.permute.xlu0 0
    %486 = vperm.xlu0 %485, %v420
    %v487 = vpop.permute.xlu0 %486
    %490 = vset.pattern.permute.xlu0 0
    %491 = vperm.xlu0 %490, %v421
    %v492 = vpop.permute.xlu0 %491
    %495 = vset.pattern.permute.xlu0 0
    %496 = vperm.xlu0 %495, %v422
    %v497 = vpop.permute.xlu0 %496
    %500 = vset.pattern.permute.xlu0 0
    %501 = vperm.xlu0 %500, %v423
    %v502 = vpop.permute.xlu0 %501
    %v504 = vmul.f32 %v392, %v427
    %v505 = vmul.f32 %v393, %v432
    %v506 = vmul.f32 %v394, %v437
    %v507 = vmul.f32 %v395, %v442
    %v508 = vmul.f32 %v396, %v447
    %v509 = vmul.f32 %v397, %v452
    %v510 = vmul.f32 %v398, %v457
    %v511 = vmul.f32 %v399, %v462
    %v512 = vmul.f32 %v400, %v467
    %v513 = vmul.f32 %v401, %v472
    %v514 = vmul.f32 %v402, %v477
    %v515 = vmul.f32 %v403, %v482
    %v516 = vmul.f32 %v404, %v487
    %v517 = vmul.f32 %v405, %v492
    %v518 = vmul.f32 %v406, %v497
    %v519 = vmul.f32 %v407, %v502
    %v520 = vadd.f32 %v504, %v505
    %v521 = vadd.f32 %v520, %v506
    %v522 = vadd.f32 %v521, %v507
    %v523 = vadd.f32 %v522, %v508
    %v524 = vadd.f32 %v523, %v509
    %v525 = vadd.f32 %v524, %v510
    %v526 = vadd.f32 %v525, %v511
    %v527 = vadd.f32 %v526, %v512
    %v528 = vadd.f32 %v527, %v513
    %v529 = vadd.f32 %v528, %v514
    %v530 = vadd.f32 %v529, %v515
    %v531 = vadd.f32 %v530, %v516
    %v532 = vadd.f32 %v531, %v517
    %v533 = vadd.f32 %v532, %v518
    %v534 = vadd.f32 %v533, %v519
    %v535 = vrot.slane %v534, 4
    %v536 = vadd.f32 %v534, %v535
    %v537 = vrot.slane %v536, 2
    %v538 = vadd.f32 %v536, %v537
    %v539 = vrot.slane %v538, 1
    %v540 = vadd.f32 %v538, %v539
    %s541 = sld [smem:[#allocation2]]
    %v542 = vstv %s541
    %v543 = vadd.f32 %v540, %v542
    %544 = vst [vmem:[#allocation3] sm:$0x1] %v543
    // Predicated region
    $region22: #{tpu_custom_call.1} parent=1 // pred_check
      _
    $region23: #{tpu_custom_call.1} parent=1 // pred_check_branch
      %546 = sbr.rel (0) target = $region25
    $region24: #{tpu_custom_call.1} parent=1 // pred_region
      %s548 = ssub.s32 16, 16
      %549 = vsyncadd [#allocation4], %s548
      %s551 = sshll.u32 [#allocation3], 4
      %s552 = int_to_ptr.vmem [resolvable:$true] %s551
      %554 = dma.vmem_to_hbm [thread:$0]  %s552, 16, %s5, [#allocation4]
    $region25: #{tpu_custom_call.1} parent=1 // pred_fallthru
      _
    // Predicated region
    $region26: #{tpu_custom_call.1} parent=1 // pred_check
      _
    $region27: #{tpu_custom_call.1} parent=1 // pred_check_branch
      %556 = sbr.rel (0) target = $region29
    $region28: #{tpu_custom_call.1} parent=1 // pred_region
      %557 = dma.done [#allocation4], 16
    $region29: #{tpu_custom_call.1} parent=1 // pred_fallthru
      _
    %558 = vsyncpa [#allocation4], 1

</llo_original>
